<compile_context>
chip_gen: v7x
topology: tpu7x:2x2x1
jax: 0.10.0
libtpu: 0.0.40
codegen_flags: <defaults>
</compile_context>

<pallas_src>
import math

import jax
import jax.numpy as jnp
from jax.experimental import pallas as pl
from jax.experimental.pallas import tpu as pltpu


_VMEM_SPEC = pl.BlockSpec(memory_space=pltpu.MemorySpace.VMEM)
_GRIDLESS_BYTES_LIMIT = 8 * 1024 * 1024   # above this, use the batch-tiled path
_DEFAULT_TILE_B = 128                     # batch rows per block in the tiled path


# ----------------------------------------------------------------------------
# Pallas kernels
# ----------------------------------------------------------------------------
def _pos_enc_cls_kernel(x_ref, pe_ref, o_ref):
    # x_ref: (b, L, D); pe_ref: (1, L+1, D) with cls_token pre-folded into row 0;
    # o_ref: (b, L+1, D).  No concat: two direct lane-dense region stores.
    b, _, d = x_ref.shape
    o_ref[:, :1, :] = jnp.broadcast_to(pe_ref[:, :1, :], (b, 1, d))
    o_ref[:, 1:, :] = x_ref[...] + pe_ref[:, 1:, :]


def _pos_enc_kernel(x_ref, pe_ref, o_ref):
    # CLS=False: plain broadcast add (pe has a size-1 batch dim).
    o_ref[...] = x_ref[...] + pe_ref[...]


# ----------------------------------------------------------------------------
# pallas_call wrappers
# ----------------------------------------------------------------------------
def _call_cls_gridless(x, pe_eff):
    B, L, D = x.shape
    S = L + 1
    return pl.pallas_call(
        _pos_enc_cls_kernel,
        out_shape=jax.ShapeDtypeStruct((B, S, D), x.dtype),
        in_specs=[_VMEM_SPEC, _VMEM_SPEC],
        out_specs=_VMEM_SPEC,
        compiler_params=pltpu.CompilerParams(allow_input_fusion=[True, True]),
    )(x, pe_eff)


def _call_cls_tiled(x, pe_eff, tb):
    B, L, D = x.shape
    S = L + 1
    tb = max(1, min(tb, B))
    return pl.pallas_call(
        _pos_enc_cls_kernel,
        out_shape=jax.ShapeDtypeStruct((B, S, D), x.dtype),
        grid=(pl.cdiv(B, tb),),
        in_specs=[
            pl.BlockSpec((tb, L, D), lambda i: (i, 0, 0)),
            pl.BlockSpec((1, S, D), lambda i: (0, 0, 0)),
        ],
        out_specs=pl.BlockSpec((tb, S, D), lambda i: (i, 0, 0)),
        compiler_params=pltpu.CompilerParams(dimension_semantics=("parallel",)),
    )(x, pe_eff)


def _call_nocls_gridless(x, pe):
    B, L, D = x.shape
    return pl.pallas_call(
        _pos_enc_kernel,
        out_shape=jax.ShapeDtypeStruct((B, L, D), x.dtype),
        in_specs=[_VMEM_SPEC, _VMEM_SPEC],
        out_specs=_VMEM_SPEC,
        # x and out have identical shape/dtype: reuse the buffer when x is donated.
        input_output_aliases={0: 0},
    )(x, pe)


def _call_nocls_tiled(x, pe, tb):
    B, L, D = x.shape
    tb = max(1, min(tb, B))
    return pl.pallas_call(
        _pos_enc_kernel,
        out_shape=jax.ShapeDtypeStruct((B, L, D), x.dtype),
        grid=(pl.cdiv(B, tb),),
        in_specs=[
            pl.BlockSpec((tb, L, D), lambda i: (i, 0, 0)),
            pl.BlockSpec((1, L, D), lambda i: (0, 0, 0)),
        ],
        out_specs=pl.BlockSpec((tb, L, D), lambda i: (i, 0, 0)),
        input_output_aliases={0: 0},
        compiler_params=pltpu.CompilerParams(dimension_semantics=("parallel",)),
    )(x, pe)


# ----------------------------------------------------------------------------
# Parameters / buffers (match PyTorch __init__)
# ----------------------------------------------------------------------------
def make_sinusoidal_pe(seq_len, d_model, dtype=jnp.float32):
    position = jnp.arange(seq_len, dtype=jnp.float32)[:, None]
    div_term = jnp.exp(
        jnp.arange(0, d_model, 2, dtype=jnp.float32) * (-math.log(10000.0) / d_model))
    pe = jnp.zeros((seq_len, d_model), jnp.float32)
    pe = pe.at[:, 0::2].set(jnp.sin(position * div_term))
    pe = pe.at[:, 1::2].set(jnp.cos(position * div_term))
    return pe[None].astype(dtype)  # (1, seq_len, d_model)


def init_positional_encoding(d_model=256, max_len=16, cls=True, dtype=jnp.float32):
    params = {'is_cls': cls, 'max_len': max_len, 'd_model': d_model}
    seq = max_len + 1 if cls else max_len
    if cls:
        # PyTorch init: nn.Parameter(torch.zeros(1, 1, d_model))
        params['cls_token'] = jnp.zeros((1, 1, d_model), dtype)
    params['pe'] = make_sinusoidal_pe(seq, d_model, dtype)
    return params


# ----------------------------------------------------------------------------
# Forward
# ----------------------------------------------------------------------------
def positional_encoding_forward(params, x, *, batch_tile=None):
    """Forward pass. `batch_tile` forces the batch-tiled grid path (testing /
    large-B); by default it is selected automatically from a VMEM-size guard."""
    B, L, D = x.shape
    pe = params['pe'].astype(x.dtype)
    itemsize = jnp.dtype(x.dtype).itemsize

    if params['is_cls']:
        S = L + 1
        assert pe.shape == (1, S, D), "input seq length must equal max_len"
        # Fold cls_token into pe row 0 (out[:, 0] = cls + pe[0]); removes one
        # kernel input and the in-kernel concatenate.
        pe_eff = pe.at[:, :1, :].add(params['cls_token'].astype(x.dtype))
        total_bytes = (B * L * D + B * S * D + S * D) * itemsize
        if batch_tile is None and total_bytes <= _GRIDLESS_BYTES_LIMIT:
            return _call_cls_gridless(x, pe_eff)
        return _call_cls_tiled(x, pe_eff, batch_tile or _DEFAULT_TILE_B)

    assert pe.shape == (1, L, D), "input seq length must equal max_len"
    total_bytes = (2 * B * L * D + L * D) * itemsize
    if batch_tile is None and total_bytes <= _GRIDLESS_BYTES_LIMIT:
        return _call_nocls_gridless(x, pe)
    return _call_nocls_tiled(x, pe, batch_tile or _DEFAULT_TILE_B)


# ----------------------------------------------------------------------------
# Plain-JAX reference (mirrors the PyTorch forward) for correctness check
# ----------------------------------------------------------------------------
def positional_encoding_reference(params, x):
    if params['is_cls']:
        B, _, D = x.shape
        cls_tokens = jnp.broadcast_to(params['cls_token'], (B, 1, D))
        x = jnp.concatenate([cls_tokens, x], axis=1)
    return x + params['pe'][: x.shape[0]]   # pe[:x.size(0)] is a no-op slice (batch dim = 1)


# ----------------------------------------------------------------------------
if __name__ == "__main__":
    key = jax.random.PRNGKey(0)
    k_x, k_cls = jax.random.split(key)

    # Module defaults: d_model=256, max_len=16, CLS=True -> output seq = 17.
    B, MAX_LEN, D_MODEL = 2, 16, 256
    x = jax.random.normal(k_x, (B, MAX_LEN, D_MODEL), jnp.float32)

    params = init_positional_encoding(d_model=D_MODEL, max_len=MAX_LEN, cls=True)
    # Use a non-zero cls_token (as a trained model would have) so the folded
    # pe path is checked non-trivially; the PyTorch *init* value is zeros.
    params['cls_token'] = 0.02 * jax.random.normal(k_cls, (1, 1, D_MODEL), jnp.float32)

    ref = positional_encoding_reference(params, x)

    # CLS=True, gridless (small-shape) path.
    out = jax.block_until_ready(positional_encoding_forward(params, x))
    assert out.shape == (B, MAX_LEN + 1, D_MODEL)
    assert bool(jnp.all(jnp.isfinite(out)))
    assert bool(jnp.allclose(out, ref, atol=1e-6, rtol=1e-6))

    # CLS=True, batch-tiled (large-B fallback) path exercised cheaply with tb=1.
    out_t = jax.block_until_ready(positional_encoding_forward(params, x, batch_tile=1))
    assert bool(jnp.allclose(out_t, ref, atol=1e-6, rtol=1e-6))

    # CLS=False path.
    params_nc = init_positional_encoding(d_model=D_MODEL, max_len=MAX_LEN, cls=False)
    ref_nc = positional_encoding_reference(params_nc, x)
    out_nc = jax.block_until_ready(positional_encoding_forward(params_nc, x))
    assert out_nc.shape == (B, MAX_LEN, D_MODEL)
    assert bool(jnp.allclose(out_nc, ref_nc, atol=1e-6, rtol=1e-6))

    print("KERNEL_OK")
</pallas_src>

<mosaic_0001>
module attributes {stable_mosaic.version = 11 : i64} {
  func.func @_pos_enc_cls_kernel(%arg0: memref<2x16x256xf32, #tpu.memory_space<vmem>>, %arg1: memref<1x17x256xf32, #tpu.memory_space<vmem>>, %arg2: memref<2x17x256xf32, #tpu.memory_space<vmem>>) attributes {dimension_semantics = [], scalar_prefetch = 0 : i64, scratch_operands = 0 : i64, tpu.core_type = #tpu.core_type<tc>} {
    %c0 = arith.constant 0 : index
    %c0_0 = arith.constant 0 : index
    %c0_1 = arith.constant 0 : index
    %0 = vector.load %arg1[%c0, %c0_0, %c0_1] : memref<1x17x256xf32, #tpu.memory_space<vmem>>, vector<1x1x256xf32>
    %1 = vector.shape_cast %0 : vector<1x1x256xf32> to vector<1x1x256xf32>
    %2 = vector.broadcast %1 : vector<1x1x256xf32> to vector<2x1x256xf32>
    %c0_2 = arith.constant 0 : index
    %c0_3 = arith.constant 0 : index
    %c0_4 = arith.constant 0 : index
    %3 = vector.load %arg2[%c0_2, %c0_3, %c0_4] : memref<2x17x256xf32, #tpu.memory_space<vmem>>, vector<2x1x256xf32>
    tpu.vector_store %arg2[%c0_2, %c0_3, %c0_4], %2 {strides = array<i32>} : memref<2x17x256xf32, #tpu.memory_space<vmem>>, vector<2x1x256xf32>,
    %c0_5 = arith.constant 0 : index
    %c0_6 = arith.constant 0 : index
    %c0_7 = arith.constant 0 : index
    %4 = vector.load %arg0[%c0_5, %c0_6, %c0_7] : memref<2x16x256xf32, #tpu.memory_space<vmem>>, vector<2x16x256xf32>
    %c0_8 = arith.constant 0 : index
    %c1 = arith.constant 1 : index
    %c0_9 = arith.constant 0 : index
    %5 = vector.load %arg1[%c0_8, %c1, %c0_9] : memref<1x17x256xf32, #tpu.memory_space<vmem>>, vector<1x16x256xf32>
    %6 = vector.broadcast %5 : vector<1x16x256xf32> to vector<2x16x256xf32>
    %7 = arith.addf %4, %6 : vector<2x16x256xf32>
    %c0_10 = arith.constant 0 : index
    %c1_11 = arith.constant 1 : index
    %c0_12 = arith.constant 0 : index
    %8 = vector.load %arg2[%c0_10, %c1_11, %c0_12] : memref<2x17x256xf32, #tpu.memory_space<vmem>>, vector<2x16x256xf32>
    tpu.vector_store %arg2[%c0_10, %c1_11, %c0_12], %7 {strides = array<i32>} : memref<2x17x256xf32, #tpu.memory_space<vmem>>, vector<2x16x256xf32>,
    return
  }
}

</mosaic_0001>

<llo_original>
// kernel: tpu_custom_call.1
$region0: #{tpu_custom_call.1}
  #allocation0 [shape = 'u32[]', space=smem, size = 0x4, offset = 0x4, fixed_abs, tag = 'smem constant byte address 0x4 - core index']
  #allocation1 [shape = 'u32[144,128]{1,0:T(1,128)}', space=vmem, size = 0x12000, scoped, tag = 'internal scratch']
  %s0 = inlined_call_operand.vmem [shape: f32[2,16,256], index: 0, kind: input, shape index: {}]
  %s1 = inlined_call_operand.vmem [shape: f32[1,17,256], index: 1, kind: input, shape index: {}]
  %s2 = inlined_call_operand.vmem [shape: f32[2,17,256], index: 2, kind: output, shape index: {}]
  %s3 = sld [smem:[#allocation0]]
  $region18: #{tpu_custom_call.1} parent=0
    _
  %s5 = ssub.s32 1, %s3
  %s6 = scalar_select 0, %s5, %s3
  // Predicated region
  $region2: #{tpu_custom_call.1} parent=0 // pred_check
    _
  $region3: #{tpu_custom_call.1} parent=0 // pred_check_branch
    %8 = sbr.rel (0) target = $region5
  $region4: #{tpu_custom_call.1} parent=0 // pred_region
    _
  $region5: #{tpu_custom_call.1} parent=0 // pred_fallthru
    _
  // Predicated region
  $region6: #{tpu_custom_call.1} parent=0 // pred_check
    _
  $region7: #{tpu_custom_call.1} parent=0 // pred_check_branch
    %10 = sbr.rel (0) target = $region9
  $region8: #{tpu_custom_call.1} parent=0 // pred_region
    _
  $region9: #{tpu_custom_call.1} parent=0 // pred_fallthru
    _
  %v11 = vld [vmem:[%s1] ss:$8 sm:$0x3]
  %v12 = vlaneseq
  %vm13 = vcmp.ge.s32.totalorder %v12, 0
  %vm14 = vcmp.lt.s32.totalorder %v12, 256
  %vm15 = vmand %vm13, %vm14
  %16 = vst.msk [vmem:[%s2] ss:$8 sm:$0x3] %vm15, %v11
  %17 = vst.msk [vmem:[%s2] ss:$8 sm:$0x0] %vm15, %v11
  %s18 = scalar_lea.vmem %s2, 48
  %19 = vst.msk [vmem:[%s18] ss:$8 sm:$0x3] %vm15, %v11
  %20 = vst.msk [vmem:[%s18] ss:$8 sm:$0x0] %vm15, %v11
  %v21 = vld [vmem:[%s0] sm:$0xff]
  %v22 = vld [vmem:[%s0 + $0x8] sm:$0xff]
  %v23 = vld [vmem:[%s0 + $0x10] sm:$0xff]
  %v24 = vld [vmem:[%s0 + $0x18] sm:$0xff]
  %v25 = vld [vmem:[%s0 + $0x20] sm:$0xff]
  %v26 = vld [vmem:[%s0 + $0x28] sm:$0xff]
  %v27 = vld [vmem:[%s0 + $0x30] sm:$0xff]
  %v28 = vld [vmem:[%s0 + $0x38] sm:$0xff]
  %v29 = vld [vmem:[%s1] sm:$0xfe]
  %v30 = vld [vmem:[%s1 + $0x8] sm:$0xfe]
  %v31 = vld [vmem:[%s1 + $0x10] sm:$0xff]
  %v32 = vld [vmem:[%s1 + $0x18] sm:$0xff]
  %v33 = vld [vmem:[%s1 + $0x20] sm:$0x1]
  %v34 = vld [vmem:[%s1 + $0x28] sm:$0x1]
  %vm41 = vcmask 1046528
  %v42 = vrot.slane %v29, 1
  %v43 = vrot.slane %v31, 1
  %v44 = vsel %vm41, %v42, %v43
  %v45 = vrot.slane %v30, 1
  %v46 = vrot.slane %v32, 1
  %v47 = vsel %vm41, %v45, %v46
  %v48 = vrot.slane %v33, 1
  %v49 = vsel %vm41, %v43, %v48
  %v50 = vrot.slane %v34, 1
  %v51 = vsel %vm41, %v46, %v50
  %v56 = vadd.f32 %v21, %v44
  %v57 = vadd.f32 %v22, %v47
  %v58 = vadd.f32 %v23, %v49
  %v59 = vadd.f32 %v24, %v51
  %v60 = vadd.f32 %v25, %v44
  %v61 = vadd.f32 %v26, %v47
  %v62 = vadd.f32 %v27, %v49
  %v63 = vadd.f32 %v28, %v51
  %vm72 = vcmask 1040384
  %v73 = vrot.slane %v56, 7
  %v74 = vrot.slane %v57, 7
  %v75 = vrot.slane %v58, 7
  %v76 = vsel %vm72, %v73, %v75
  %v77 = vrot.slane %v59, 7
  %v78 = vsel %vm72, %v74, %v77
  %v79 = vrot.slane %v60, 7
  %v80 = vrot.slane %v61, 7
  %v81 = vrot.slane %v62, 7
  %v82 = vsel %vm72, %v79, %v81
  %v83 = vrot.slane %v63, 7
  %v84 = vsel %vm72, %v80, %v83
  %97 = vst [vmem:[%s2] sm:$0xfe] %v73
  %98 = vst [vmem:[%s2 + $0x8] sm:$0xfe] %v74
  %99 = vst [vmem:[%s2 + $0x10] sm:$0xff] %v76
  %100 = vst [vmem:[%s2 + $0x18] sm:$0xff] %v78
  %101 = vst [vmem:[%s2 + $0x20] sm:$0x1] %v75
  %102 = vst [vmem:[%s2 + $0x28] sm:$0x1] %v77
  %103 = vst [vmem:[%s2 + $0x30] sm:$0xfe] %v79
  %104 = vst [vmem:[%s2 + $0x38] sm:$0xfe] %v80
  %105 = vst [vmem:[%s2 + $0x40] sm:$0xff] %v82
  %106 = vst [vmem:[%s2 + $0x48] sm:$0xff] %v84
  %107 = vst [vmem:[%s2 + $0x50] sm:$0x1] %v81
  %108 = vst [vmem:[%s2 + $0x58] sm:$0x1] %v83
  // Predicated region
  $region10: #{tpu_custom_call.1} parent=0 // pred_check
    _
  $region11: #{tpu_custom_call.1} parent=0 // pred_check_branch
    %110 = sbr.rel (0) target = $region13
  $region12: #{tpu_custom_call.1} parent=0 // pred_region
    _
  $region13: #{tpu_custom_call.1} parent=0 // pred_fallthru
    _
  // Predicated region
  $region14: #{tpu_custom_call.1} parent=0 // pred_check
    _
  $region15: #{tpu_custom_call.1} parent=0 // pred_check_branch
    %112 = sbr.rel (0) target = $region17
  $region16: #{tpu_custom_call.1} parent=0 // pred_region
    _
  $region17: #{tpu_custom_call.1} parent=0 // pred_fallthru
    _

</llo_original>
